<compile_context>
chip_gen: v7x
topology: tpu7x:2x2x1
jax: 0.10.0
libtpu: 0.0.40
codegen_flags: <defaults>
</compile_context>

<pallas_src>
import jax
import jax.numpy as jnp
from jax.experimental import pallas as pl
from jax.experimental.pallas import tpu as pltpu


def _ddnn_stat_kernel(xt_ref, w1_ref, b1_ref, w2_ref, b2_ref, w3_ref, b3_ref,
                      o_ref):
    """One tile of TM rows; rows are on the LANE axis throughout.

    xt_ref : (T, TM)  hours on sublanes, rows on lanes (lane-dense input)
    w1_ref : (H, 3)   columns act on [max, min, hour-sum] (1/T pre-folded)
    b1_ref : (H, 1)
    w2_ref : (H, H)   conv_2 weight (H_out, H_in), bf16
    b2_ref : (H, 1)
    w3_ref : (H, C)   conv_3 weight, transposed
    b3_ref : (C, 1)
    o_ref  : (C, TM)  lane-dense sigmoid outputs
    """
    x = xt_ref[...].astype(jnp.float32)                     # (T, TM), f32 stats

    # --- stats over the hour axis: cheap sublane reductions -------------------
    xmax = jnp.max(x, axis=0, keepdims=True)                 # (1, TM)
    xmin = jnp.min(x, axis=0, keepdims=True)                 # (1, TM)
    xsum = jnp.sum(x, axis=0, keepdims=True)                 # (1, TM); 1/T in w1

    # --- layer 1: three VPU outer-product FMAs -> (H, TM), fully lane-dense ---
    w1 = w1_ref[...]                                         # (H, 3)
    h1t = (w1[:, 0:1] * xmax + w1[:, 1:2] * xmin + w1[:, 2:3] * xsum
           + b1_ref[...])                                    # (H, TM)
    h1t = jnp.maximum(h1t, 0.0)

    # --- layer 2: single MXU matmul, bf16 operands, f32 accumulate ------------
    h2t = jax.lax.dot_general(
        w2_ref[...],                                         # (H_out, H_in) bf16
        h1t.astype(jnp.bfloat16),                            # (H_in,  TM)   bf16
        dimension_numbers=(((1,), (0,)), ((), ())),
        preferred_element_type=jnp.float32)                  # (H_out, TM)   f32
    h2t = jnp.maximum(h2t + b2_ref[...], 0.0)

    # --- layer 3 ---------------------------------------------------------------
    C = w3_ref.shape[1]
    if C == 1:
        # One channel: VPU multiply + sublane reduce (no MXU / concat needed).
        logits = (jnp.sum(h2t * w3_ref[...], axis=0, keepdims=True)
                  + b3_ref[...])                             # (1, TM)
    else:
        # Multi-channel: one (C, H) x (H, TM) contraction on the idle MXU.
        logits = jax.lax.dot_general(
            w3_ref[...], h2t,
            dimension_numbers=(((0,), (0,)), ((), ())),
            preferred_element_type=jnp.float32) + b3_ref[...]  # (C, TM)

    o_ref[...] = jax.nn.sigmoid(logits)                      # lane-dense store


def _round_up(n, m):
    return ((n + m - 1) // m) * m


def degree_days_dnn_stat(temperature, params, *, tile_rows=8192,
                         cast_input_to_bf16=False):
    """temperature: (B, S, T) float; params from `init_params` (kernel layouts)."""
    w1, b1, w2, b2, w3t, b3 = params
    H = w2.shape[0]
    C = w3t.shape[1]
    B, S, T = temperature.shape
    N = B * S

    # Re-orient on the host: hours -> sublanes, rows -> lanes.  Layout plumbing
    # only (one extra read+write of the input), removes all in-kernel XLU work.
    xt = jnp.moveaxis(temperature, -1, 0).reshape(T, N)      # (T, N)
    if cast_input_to_bf16:
        xt = xt.astype(jnp.bfloat16)   # halves HBM read; stats stay f32 in-kernel

    # Fold 1/T into the 'mean' column so the kernel uses the raw hour-sum.
    w1_folded = w1 * jnp.array([1.0, 1.0, 1.0 / T], dtype=w1.dtype)
    w2_bf16 = w2.astype(jnp.bfloat16)

    # Row tile: multiple of 128, as large as sensible; keep >= 2 grid steps when
    # there is more than one tile's worth of rows so ("parallel",) can shard the
    # row grid across both v7x TensorCores.
    tm = max(128, (int(tile_rows) // 128) * 128)
    tm = min(tm, _round_up(N, 128))
    if N > 128:
        tm = min(tm, max(128, _round_up((N + 1) // 2, 128)))
    grid = (N + tm - 1) // tm
    n_pad = grid * tm

    flops_per_row = 3 * T + 2 * 3 * H + 2 * H * H + 2 * H * C + 4 * H + 4 * C
    cost = pl.CostEstimate(
        flops=int(N * flops_per_row),
        transcendentals=int(N * C),
        bytes_accessed=int(xt.size * xt.dtype.itemsize + n_pad * C * 4
                           + w2_bf16.size * 2
                           + (w1.size + b1.size + b2.size + w3t.size + b3.size) * 4))

    out_flat = pl.pallas_call(
        _ddnn_stat_kernel,
        out_shape=jax.ShapeDtypeStruct((C, n_pad), jnp.float32),
        grid=(grid,),
        in_specs=[
            pl.BlockSpec((T, tm), lambda i: (0, i)),   # temperature (T, tm)
            pl.BlockSpec((H, 3), lambda i: (0, 0)),    # W1   (H, 3)
            pl.BlockSpec((H, 1), lambda i: (0, 0)),    # b1   (H, 1)
            pl.BlockSpec((H, H), lambda i: (0, 0)),    # W2   (H, H) bf16
            pl.BlockSpec((H, 1), lambda i: (0, 0)),    # b2   (H, 1)
            pl.BlockSpec((H, C), lambda i: (0, 0)),    # W3^T (H, C)
            pl.BlockSpec((C, 1), lambda i: (0, 0)),    # b3   (C, 1)
        ],
        out_specs=pl.BlockSpec((C, tm), lambda i: (0, i)),
        compiler_params=pltpu.CompilerParams(
            dimension_semantics=("parallel",),         # shard rows over TCs (v7x)
            vmem_limit_bytes=32 * 1024 * 1024),        # safe within v7x's 64 MiB
        cost_estimate=cost,
    )(xt, w1_folded, b1, w2_bf16, b2, w3t, b3)          # (C, n_pad)

    if C == 1:
        return out_flat[0, :N].reshape(B, S)
    return jnp.moveaxis(out_flat[:, :N].reshape(C, B, S), 0, 1)   # (B, C, S)


def init_params(key, hidden_size, num_out_channels):
    """Synthetic weights in the module's Conv2d shapes, converted to kernel layouts."""
    k1, k2, k3, k4, k5, k6 = jax.random.split(key, 6)
    H, C = hidden_size, num_out_channels
    # torch shapes: conv1 (H,1,1,3), conv2 (H,1,1,H), conv3 (C,1,1,H)
    conv1_w = jax.random.normal(k1, (H, 1, 1, 3), jnp.float32) * 0.3
    conv1_b = jax.random.normal(k2, (H,), jnp.float32) * 0.1
    conv2_w = jax.random.normal(k3, (H, 1, 1, H), jnp.float32) * 0.1
    conv2_b = jax.random.normal(k4, (H,), jnp.float32) * 0.1
    conv3_w = jax.random.normal(k5, (C, 1, 1, H), jnp.float32) * 0.1
    conv3_b = jax.random.normal(k6, (C,), jnp.float32) * 0.1
    # Kernel layouts.
    w1 = conv1_w.reshape(H, 3)          # (H, 3): columns act on [max, min, mean]
    b1 = conv1_b.reshape(H, 1)          # (H, 1)
    w2 = conv2_w.reshape(H, H)          # (H_out, H_in): used as-is (W2 @ h1t)
    b2 = conv2_b.reshape(H, 1)          # (H, 1)
    w3t = conv3_w.reshape(C, H).T       # (H, C)
    b3 = conv3_b.reshape(C, 1)          # (C, 1)
    return (w1, b1, w2, b2, w3t, b3)


def _reference(temperature, params):
    """Pure-JAX f32 reference of the torch forward semantics."""
    w1, b1, w2, b2, w3t, b3 = params
    feat = jnp.stack([
        jnp.max(temperature, axis=-1),
        jnp.min(temperature, axis=-1),
        jnp.mean(temperature, axis=-1)], axis=-1)                  # (B, S, 3)
    h1 = jax.nn.relu(feat @ w1.T + b1[:, 0])                       # (B, S, H)
    h2 = jax.nn.relu(h1 @ w2.T + b2[:, 0])                         # (B, S, H)
    out = jax.nn.sigmoid(h2 @ w3t + b3[:, 0])                      # (B, S, C)
    out = jnp.transpose(out, (0, 2, 1))                            # (B, C, S)
    if out.shape[1] == 1:
        out = out[:, 0, :]
    return out


if __name__ == "__main__":
    key = jax.random.PRNGKey(0)
    kx1, kp1, kx2, kp2 = jax.random.split(key, 4)

    # --- config 1: module defaults (hidden=64, C=1), ragged row count ---------
    B1, S1, T1, H1, C1 = 2, 200, 24, 64, 1
    temp1 = jax.random.normal(kx1, (B1, S1, T1), jnp.float32) * 10.0 + 15.0
    params1 = init_params(kp1, H1, C1)
    out1 = jax.block_until_ready(degree_days_dnn_stat(temp1, params1))
    ref1 = _reference(temp1, params1)
    assert out1.shape == ref1.shape == (B1, S1), (out1.shape, ref1.shape)
    # Layer-2 runs bf16 x bf16 (f32 accumulate) on the MXU; tolerance loosened
    # vs. the all-f32 reference accordingly.
    err1 = float(jnp.max(jnp.abs(out1 - ref1)))
    assert err1 < 2e-2, err1

    # --- config 2: multi-channel output (exercises the MXU layer-3 path) ------
    B2, S2, T2, H2, C2 = 2, 128, 24, 32, 3
    temp2 = jax.random.normal(kx2, (B2, S2, T2), jnp.float32) * 10.0 + 15.0
    params2 = init_params(kp2, H2, C2)
    out2 = jax.block_until_ready(degree_days_dnn_stat(temp2, params2))
    ref2 = _reference(temp2, params2)
    assert out2.shape == ref2.shape == (B2, C2, S2), (out2.shape, ref2.shape)
    err2 = float(jnp.max(jnp.abs(out2 - ref2)))
    assert err2 < 2e-2, err2

    # --- bf16-input variant (halves HBM read; largest relative win on v5e) ----
    out1_bf16 = jax.block_until_ready(
        degree_days_dnn_stat(temp1, params1, cast_input_to_bf16=True))
    err3 = float(jnp.max(jnp.abs(out1_bf16 - ref1)))
    assert err3 < 8e-2, err3

    print("KERNEL_OK")
</pallas_src>

<mosaic_0001>
module attributes {stable_mosaic.version = 11 : i64} {
  func.func @_ddnn_stat_kernel(%arg0: i32, %arg1: memref<24x256xf32, #tpu.memory_space<vmem>>, %arg2: memref<64x3xf32, #tpu.memory_space<vmem>>, %arg3: memref<64x1xf32, #tpu.memory_space<vmem>>, %arg4: memref<64x64xbf16, #tpu.memory_space<vmem>>, %arg5: memref<64x1xf32, #tpu.memory_space<vmem>>, %arg6: memref<64x1xf32, #tpu.memory_space<vmem>>, %arg7: memref<1x1xf32, #tpu.memory_space<vmem>>, %arg8: memref<1x256xf32, #tpu.memory_space<vmem>>) attributes {dimension_semantics = [#tpu.dimension_semantics<parallel>], iteration_bounds = array<i64: 2>, scalar_prefetch = 0 : i64, scratch_operands = 0 : i64, tpu.core_type = #tpu.core_type<tc>, window_params = [{transform_indices = @transform_0, window_bounds = array<i64: 24, 256>}, {pipeline_mode = #tpu.pipeline_mode<synchronous>, transform_indices = @transform_1, window_bounds = array<i64: 64, 3>}, {pipeline_mode = #tpu.pipeline_mode<synchronous>, transform_indices = @transform_2, window_bounds = array<i64: 64, 1>}, {pipeline_mode = #tpu.pipeline_mode<synchronous>, transform_indices = @transform_3, window_bounds = array<i64: 64, 64>}, {pipeline_mode = #tpu.pipeline_mode<synchronous>, transform_indices = @transform_4, window_bounds = array<i64: 64, 1>}, {pipeline_mode = #tpu.pipeline_mode<synchronous>, transform_indices = @transform_5, window_bounds = array<i64: 64, 1>}, {pipeline_mode = #tpu.pipeline_mode<synchronous>, transform_indices = @transform_6, window_bounds = array<i64: 1, 1>}, {transform_indices = @transform_7, window_bounds = array<i64: 1, 256>}]} {
    %c0 = arith.constant 0 : index
    %c0_0 = arith.constant 0 : index
    %0 = vector.load %arg1[%c0, %c0_0] : memref<24x256xf32, #tpu.memory_space<vmem>>, vector<24x256xf32>
    %cst = arith.constant dense<0xFF800000> : vector<256xf32>
    %1 = vector.multi_reduction <maximumf>, %0, %cst [0] : vector<24x256xf32> to vector<256xf32>
    %2 = vector.shape_cast %1 : vector<256xf32> to vector<1x256xf32>
    %cst_1 = arith.constant dense<0x7F800000> : vector<256xf32>
    %3 = vector.multi_reduction <minimumf>, %0, %cst_1 [0] : vector<24x256xf32> to vector<256xf32>
    %4 = vector.shape_cast %3 : vector<256xf32> to vector<1x256xf32>
    %cst_2 = arith.constant dense<0.000000e+00> : vector<256xf32>
    %5 = vector.multi_reduction <add>, %0, %cst_2 [0] : vector<24x256xf32> to vector<256xf32>
    %6 = vector.shape_cast %5 : vector<256xf32> to vector<1x256xf32>
    %c0_3 = arith.constant 0 : index
    %c0_4 = arith.constant 0 : index
    %7 = vector.load %arg2[%c0_3, %c0_4] : memref<64x3xf32, #tpu.memory_space<vmem>>, vector<64x3xf32>
    %8 = vector.extract_strided_slice %7 {offsets = [0, 0], sizes = [64, 1], strides = [1, 1]} : vector<64x3xf32> to vector<64x1xf32>
    %9 = vector.broadcast %8 : vector<64x1xf32> to vector<64x256xf32>
    %10 = vector.broadcast %2 : vector<1x256xf32> to vector<64x256xf32>
    %11 = arith.mulf %9, %10 : vector<64x256xf32>
    %12 = vector.extract_strided_slice %7 {offsets = [0, 1], sizes = [64, 1], strides = [1, 1]} : vector<64x3xf32> to vector<64x1xf32>
    %13 = vector.broadcast %12 : vector<64x1xf32> to vector<64x256xf32>
    %14 = vector.broadcast %4 : vector<1x256xf32> to vector<64x256xf32>
    %15 = arith.mulf %13, %14 : vector<64x256xf32>
    %16 = arith.addf %11, %15 : vector<64x256xf32>
    %17 = vector.extract_strided_slice %7 {offsets = [0, 2], sizes = [64, 1], strides = [1, 1]} : vector<64x3xf32> to vector<64x1xf32>
    %18 = vector.broadcast %17 : vector<64x1xf32> to vector<64x256xf32>
    %19 = vector.broadcast %6 : vector<1x256xf32> to vector<64x256xf32>
    %20 = arith.mulf %18, %19 : vector<64x256xf32>
    %21 = arith.addf %16, %20 : vector<64x256xf32>
    %c0_5 = arith.constant 0 : index
    %c0_6 = arith.constant 0 : index
    %22 = vector.load %arg3[%c0_5, %c0_6] : memref<64x1xf32, #tpu.memory_space<vmem>>, vector<64x1xf32>
    %23 = vector.broadcast %22 : vector<64x1xf32> to vector<64x256xf32>
    %24 = arith.addf %21, %23 : vector<64x256xf32>
    %cst_7 = arith.constant 0.000000e+00 : f32
    %25 = vector.broadcast %cst_7 : f32 to vector<64x256xf32>
    %26 = arith.maximumf %24, %25 : vector<64x256xf32>
    %c0_8 = arith.constant 0 : index
    %c0_9 = arith.constant 0 : index
    %27 = vector.load %arg4[%c0_8, %c0_9] : memref<64x64xbf16, #tpu.memory_space<vmem>>, vector<64x64xbf16>
    %28 = arith.truncf %26 : vector<64x256xf32> to vector<64x256xbf16>
    %cst_10 = arith.constant dense<0.000000e+00> : vector<64x256xf32>
    %29 = tpu.matmul %27, %28, %cst_10 {dimension_numbers = #tpu.dot_dimension_numbers<[1], [0], [0], [1], [0, 0, 1, 1], [], []>} : vector<64x64xbf16>, vector<64x256xbf16>, vector<64x256xf32> -> vector<64x256xf32>
    %c0_11 = arith.constant 0 : index
    %c0_12 = arith.constant 0 : index
    %30 = vector.load %arg5[%c0_11, %c0_12] : memref<64x1xf32, #tpu.memory_space<vmem>>, vector<64x1xf32>
    %31 = vector.broadcast %30 : vector<64x1xf32> to vector<64x256xf32>
    %32 = arith.addf %29, %31 : vector<64x256xf32>
    %cst_13 = arith.constant 0.000000e+00 : f32
    %33 = vector.broadcast %cst_13 : f32 to vector<64x256xf32>
    %34 = arith.maximumf %32, %33 : vector<64x256xf32>
    %c0_14 = arith.constant 0 : index
    %c0_15 = arith.constant 0 : index
    %35 = vector.load %arg6[%c0_14, %c0_15] : memref<64x1xf32, #tpu.memory_space<vmem>>, vector<64x1xf32>
    %36 = vector.broadcast %35 : vector<64x1xf32> to vector<64x256xf32>
    %37 = arith.mulf %34, %36 : vector<64x256xf32>
    %cst_16 = arith.constant dense<0.000000e+00> : vector<256xf32>
    %38 = vector.multi_reduction <add>, %37, %cst_16 [0] : vector<64x256xf32> to vector<256xf32>
    %39 = vector.shape_cast %38 : vector<256xf32> to vector<1x256xf32>
    %c0_17 = arith.constant 0 : index
    %c0_18 = arith.constant 0 : index
    %40 = vector.load %arg7[%c0_17, %c0_18] : memref<1x1xf32, #tpu.memory_space<vmem>>, vector<1x1xf32>
    %41 = vector.broadcast %40 : vector<1x1xf32> to vector<1x256xf32>
    %42 = arith.addf %39, %41 : vector<1x256xf32>
    %43 = arith.negf %42 : vector<1x256xf32>
    %44 = math.exp %43 : vector<1x256xf32>
    %cst_19 = arith.constant 1.000000e+00 : f32
    %45 = vector.broadcast %cst_19 : f32 to vector<1x256xf32>
    %46 = arith.addf %45, %44 : vector<1x256xf32>
    %47 = arith.divf %45, %46 : vector<1x256xf32>
    %c0_20 = arith.constant 0 : index
    %c0_21 = arith.constant 0 : index
    %48 = vector.load %arg8[%c0_20, %c0_21] : memref<1x256xf32, #tpu.memory_space<vmem>>, vector<1x256xf32>
    tpu.vector_store %arg8[%c0_20, %c0_21], %47 {strides = array<i32>} : memref<1x256xf32, #tpu.memory_space<vmem>>, vector<1x256xf32>,
    return
  }
  func.func @transform_0(%arg0: i32) -> (i32, i32) {
    %c0_i32 = arith.constant 0 : i32
    %c0_i32_0 = arith.constant 0 : i32
    return %c0_i32, %arg0 : i32, i32
  }
  func.func @transform_1(%arg0: i32) -> (i32, i32) {
    %c0_i32 = arith.constant 0 : i32
    %c0_i32_0 = arith.constant 0 : i32
    %c0_i32_1 = arith.constant 0 : i32
    return %c0_i32, %c0_i32_0 : i32, i32
  }
  func.func @transform_2(%arg0: i32) -> (i32, i32) {
    %c0_i32 = arith.constant 0 : i32
    %c0_i32_0 = arith.constant 0 : i32
    %c0_i32_1 = arith.constant 0 : i32
    return %c0_i32, %c0_i32_0 : i32, i32
  }
  func.func @transform_3(%arg0: i32) -> (i32, i32) {
    %c0_i32 = arith.constant 0 : i32
    %c0_i32_0 = arith.constant 0 : i32
    %c0_i32_1 = arith.constant 0 : i32
    return %c0_i32, %c0_i32_0 : i32, i32
  }
  func.func @transform_4(%arg0: i32) -> (i32, i32) {
    %c0_i32 = arith.constant 0 : i32
    %c0_i32_0 = arith.constant 0 : i32
    %c0_i32_1 = arith.constant 0 : i32
    return %c0_i32, %c0_i32_0 : i32, i32
  }
  func.func @transform_5(%arg0: i32) -> (i32, i32) {
    %c0_i32 = arith.constant 0 : i32
    %c0_i32_0 = arith.constant 0 : i32
    %c0_i32_1 = arith.constant 0 : i32
    return %c0_i32, %c0_i32_0 : i32, i32
  }
  func.func @transform_6(%arg0: i32) -> (i32, i32) {
    %c0_i32 = arith.constant 0 : i32
    %c0_i32_0 = arith.constant 0 : i32
    %c0_i32_1 = arith.constant 0 : i32
    return %c0_i32, %c0_i32_0 : i32, i32
  }
  func.func @transform_7(%arg0: i32) -> (i32, i32) {
    %c0_i32 = arith.constant 0 : i32
    %c0_i32_0 = arith.constant 0 : i32
    return %c0_i32, %arg0 : i32, i32
  }
}

</mosaic_0001>

<llo_original>
// kernel: tpu_custom_call.1
$region0: #{tpu_custom_call.1}
  #allocation0 [shape = 'u32[]', space=smem, size = 0x4, offset = 0x4, fixed_abs, tag = 'smem constant byte address 0x4 - core index']
  #allocation1 [shape = 'u32[144,128]{1,0:T(1,128)}', space=vmem, size = 0x12000, scoped, tag = 'internal scratch']
  #allocation2 [shape = 'f32[1,1]{1,0:T(1,128)S(1)}', space=vmem, size = 0x200, scoped, tag = 'scoped memory for tpu_custom_call.1']
  %s0 = inlined_call_operand.vmem [shape: f32[24,400], index: 0, kind: input, shape index: {}]
  %s1 = inlined_call_operand.vmem [shape: f32[64,3], index: 1, kind: input, shape index: {}]
  %s2 = inlined_call_operand.vmem [shape: f32[64,1], index: 2, kind: input, shape index: {}]
  %s3 = inlined_call_operand.vmem [shape: bf16[64,64], index: 3, kind: input, shape index: {}]
  %s4 = inlined_call_operand.vmem [shape: f32[64,1], index: 4, kind: input, shape index: {}]
  %s5 = inlined_call_operand.vmem [shape: f32[64,1], index: 5, kind: input, shape index: {}]
  %s6 = inlined_call_operand.<no memory space> [shape: f32[1,1], index: 6, kind: input, shape index: {}]
  %s7 = inlined_call_operand.hbm [shape: f32[1,512], index: 7, kind: output, shape index: {}]
  %s8 = sld [smem:[#allocation0]]
  $region84: #{tpu_custom_call.1} parent=0
    _
  %s10 = ssub.s32 1, %s8
  %s11 = scalar_select 0, %s10, %s8
  %v12 = vstv %s6
  %13 = vst [vmem:[#allocation2] sm:$0x1] %v12
  $region1: #{tpu_custom_call.1} parent=0
    #allocation3 [shape = 'u8[49152]{0}', space=vmem, size = 0xc000, scoped, tag = 'input window, operand 0']
    #allocation4 [shape = 'u8[2048]{0}', space=vmem, size = 0x800, scoped, tag = 'output window, operand 0']
    #allocation5 [shape = 's32[2]{0}', space=sflag, size = 0x8, scoped, tag = 'scoped memory for tpu_custom_call.1']
    %14 = vsyncpa [#allocation5], 0
    %s15 = scalar_lea.sflag [#allocation5], 1
    %16 = vsyncpa %s15, 0
    loop: start=0, step=1, limit=4
    $region2: #{tpu_custom_call.1} parent=1 // loop_pre_header
      _
    $region3: #{tpu_custom_call.1} parent=1 // loop_header
      %s18 = sphi 0, %s22
      %p19 = scmp.ge.s32.totalorder %s18, 4
      %s28 = sphi 0, %s30
      %s31 = sphi 0, %s28
      %s32 = sphi 0, %s31
      %s48 = sphi 0, %s32
      %s52 = sphi 0, %s52
      %s54 = sphi 0, %s52
      %s55 = sphi 0, %s54
      %s69 = sphi 0, %s55
      %s73 = sphi 0, %s73
      %s75 = sphi 0, %s73
      %s76 = sphi 0, %s75
      %s90 = sphi 0, %s76
      %s94 = sphi 0, %s94
      %s96 = sphi 0, %s94
      %s97 = sphi 0, %s96
      %s111 = sphi 0, %s97
      %s115 = sphi 0, %s115
      %s117 = sphi 0, %s115
      %s118 = sphi 0, %s117
      %s132 = sphi 0, %s118
      %s136 = sphi 0, %s136
      %s138 = sphi 0, %s136
      %s139 = sphi 0, %s138
      %s153 = sphi 0, %s139
      %s157 = sphi 0, %s157
      %s159 = sphi 0, %s157
      %s160 = sphi 0, %s159
      %s174 = sphi 0, %s160
      %s180 = sphi 0, %s182
      %s183 = sphi 0, %s180
      %s184 = sphi 0, %s183
      %s200 = sphi 0, %s184
    $region4: #{tpu_custom_call.1} parent=1 // loop_header_branch
      %21 = sbr.rel (%p19) target = $region8
    $region5: #{tpu_custom_call.1} parent=1 // loop_body
      %s23 = ssub.s32 %s18, 1
      %s24 = ssub.s32 %s18, 2
      %s25 = sadd.s32 %s18, 1
      %s26 = ssub.s32 %s18, %s25
      %p27 = scmp.eq.s32.totalorder %s26, 0
      %s29 = sadd.s32 %s28, 1
      %s30 = scalar_select %p27, %s28, %s29
      %p33 = pneg %p27
      %p34 = scmp.eq.s32.totalorder %s18, 1
      %p35 = por %p33, %p34
      %p36 = scmp.ne.s32.totalorder %s28, %s31
      %p37 = scmp.eq.s32.totalorder %s18, 0
      %p38 = por %p36, %p37
      %p39 = scmp.ne.s32.totalorder %s28, %s31
      %p40 = scmp.eq.s32.totalorder %s23, 1
      %p41 = por %p39, %p40
      %p42 = scmp.ne.s32.totalorder %s31, %s32
      %p43 = scmp.eq.s32.totalorder %s23, 0
      %p44 = por %p42, %p43
      %p45 = scmp.ne.s32.totalorder %s31, %s32
      %p46 = scmp.eq.s32.totalorder %s24, 1
      %p47 = por %p45, %p46
      %p49 = scmp.ne.s32.totalorder %s32, %s48
      %p50 = scmp.eq.s32.totalorder %s24, 0
      %p51 = por %p49, %p50
      %s53 = sadd.s32 %s52, 1
      %p56 = scmp.eq.s32.totalorder %s18, 1
      %p57 = scmp.ne.s32.totalorder %s52, %s54
      %p58 = scmp.eq.s32.totalorder %s18, 0
      %p59 = por %p57, %p58
      %p60 = scmp.ne.s32.totalorder %s52, %s54
      %p61 = scmp.eq.s32.totalorder %s23, 1
      %p62 = por %p60, %p61
      %p63 = scmp.ne.s32.totalorder %s54, %s55
      %p64 = scmp.eq.s32.totalorder %s23, 0
      %p65 = por %p63, %p64
      %p66 = scmp.ne.s32.totalorder %s54, %s55
      %p67 = scmp.eq.s32.totalorder %s24, 1
      %p68 = por %p66, %p67
      %p70 = scmp.ne.s32.totalorder %s55, %s69
      %p71 = scmp.eq.s32.totalorder %s24, 0
      %p72 = por %p70, %p71
      %s74 = sadd.s32 %s73, 1
      %p77 = scmp.eq.s32.totalorder %s18, 1
      %p78 = scmp.ne.s32.totalorder %s73, %s75
      %p79 = scmp.eq.s32.totalorder %s18, 0
      %p80 = por %p78, %p79
      %p81 = scmp.ne.s32.totalorder %s73, %s75
      %p82 = scmp.eq.s32.totalorder %s23, 1
      %p83 = por %p81, %p82
      %p84 = scmp.ne.s32.totalorder %s75, %s76
      %p85 = scmp.eq.s32.totalorder %s23, 0
      %p86 = por %p84, %p85
      %p87 = scmp.ne.s32.totalorder %s75, %s76
      %p88 = scmp.eq.s32.totalorder %s24, 1
      %p89 = por %p87, %p88
      %p91 = scmp.ne.s32.totalorder %s76, %s90
      %p92 = scmp.eq.s32.totalorder %s24, 0
      %p93 = por %p91, %p92
      %s95 = sadd.s32 %s94, 1
      %p98 = scmp.eq.s32.totalorder %s18, 1
      %p99 = scmp.ne.s32.totalorder %s94, %s96
      %p100 = scmp.eq.s32.totalorder %s18, 0
      %p101 = por %p99, %p100
      %p102 = scmp.ne.s32.totalorder %s94, %s96
      %p103 = scmp.eq.s32.totalorder %s23, 1
      %p104 = por %p102, %p103
      %p105 = scmp.ne.s32.totalorder %s96, %s97
      %p106 = scmp.eq.s32.totalorder %s23, 0
      %p107 = por %p105, %p106
      %p108 = scmp.ne.s32.totalorder %s96, %s97
      %p109 = scmp.eq.s32.totalorder %s24, 1
      %p110 = por %p108, %p109
      %p112 = scmp.ne.s32.totalorder %s97, %s111
      %p113 = scmp.eq.s32.totalorder %s24, 0
      %p114 = por %p112, %p113
      %s116 = sadd.s32 %s115, 1
      %p119 = scmp.eq.s32.totalorder %s18, 1
      %p120 = scmp.ne.s32.totalorder %s115, %s117
      %p121 = scmp.eq.s32.totalorder %s18, 0
      %p122 = por %p120, %p121
      %p123 = scmp.ne.s32.totalorder %s115, %s117
      %p124 = scmp.eq.s32.totalorder %s23, 1
      %p125 = por %p123, %p124
      %p126 = scmp.ne.s32.totalorder %s117, %s118
      %p127 = scmp.eq.s32.totalorder %s23, 0
      %p128 = por %p126, %p127
      %p129 = scmp.ne.s32.totalorder %s117, %s118
      %p130 = scmp.eq.s32.totalorder %s24, 1
      %p131 = por %p129, %p130
      %p133 = scmp.ne.s32.totalorder %s118, %s132
      %p134 = scmp.eq.s32.totalorder %s24, 0
      %p135 = por %p133, %p134
      %s137 = sadd.s32 %s136, 1
      %p140 = scmp.eq.s32.totalorder %s18, 1
      %p141 = scmp.ne.s32.totalorder %s136, %s138
      %p142 = scmp.eq.s32.totalorder %s18, 0
      %p143 = por %p141, %p142
      %p144 = scmp.ne.s32.totalorder %s136, %s138
      %p145 = scmp.eq.s32.totalorder %s23, 1
      %p146 = por %p144, %p145
      %p147 = scmp.ne.s32.totalorder %s138, %s139
      %p148 = scmp.eq.s32.totalorder %s23, 0
      %p149 = por %p147, %p148
      %p150 = scmp.ne.s32.totalorder %s138, %s139
      %p151 = scmp.eq.s32.totalorder %s24, 1
      %p152 = por %p150, %p151
      %p154 = scmp.ne.s32.totalorder %s139, %s153
      %p155 = scmp.eq.s32.totalorder %s24, 0
      %p156 = por %p154, %p155
      %s158 = sadd.s32 %s157, 1
      %p161 = scmp.eq.s32.totalorder %s18, 1
      %p162 = scmp.ne.s32.totalorder %s157, %s159
      %p163 = scmp.eq.s32.totalorder %s18, 0
      %p164 = por %p162, %p163
      %p165 = scmp.ne.s32.totalorder %s157, %s159
      %p166 = scmp.eq.s32.totalorder %s23, 1
      %p167 = por %p165, %p166
      %p168 = scmp.ne.s32.totalorder %s159, %s160
      %p169 = scmp.eq.s32.totalorder %s23, 0
      %p170 = por %p168, %p169
      %p171 = scmp.ne.s32.totalorder %s159, %s160
      %p172 = scmp.eq.s32.totalorder %s24, 1
      %p173 = por %p171, %p172
      %p175 = scmp.ne.s32.totalorder %s160, %s174
      %p176 = scmp.eq.s32.totalorder %s24, 0
      %p177 = por %p175, %p176
      %s178 = ssub.s32 %s18, %s25
      %p179 = scmp.eq.s32.totalorder %s178, 0
      %s181 = sadd.s32 %s180, 1
      %s182 = scalar_select %p179, %s180, %s181
      %p185 = pneg %p179
      %p186 = scmp.eq.s32.totalorder %s18, 1
      %p187 = por %p185, %p186
      %p188 = scmp.ne.s32.totalorder %s180, %s183
      %p189 = scmp.eq.s32.totalorder %s18, 0
      %p190 = por %p188, %p189
      %p191 = scmp.ne.s32.totalorder %s180, %s183
      %p192 = scmp.eq.s32.totalorder %s23, 1
      %p193 = por %p191, %p192
      %p194 = scmp.ne.s32.totalorder %s183, %s184
      %p195 = scmp.eq.s32.totalorder %s23, 0
      %p196 = por %p194, %p195
      %p197 = scmp.ne.s32.totalorder %s183, %s184
      %p198 = scmp.eq.s32.totalorder %s24, 1
      %p199 = por %p197, %p198
      %p201 = scmp.ne.s32.totalorder %s184, %s200
      %p202 = scmp.eq.s32.totalorder %s24, 0
      %p203 = por %p201, %p202
      %p204 = scmp.le.s32.totalorder 1, %s18
      %p205 = scmp.lt.s32.totalorder %s18, 3
      %p206 = pnand %p204, %p205
      %p207 = pneg %p206
      // Predicated region
      $region9: #{tpu_custom_call.1} parent=5 // pred_check
        _
      $region10: #{tpu_custom_call.1} parent=5 // pred_check_branch
        %209 = sbr.rel (%p206) target = $region12
      $region11: #{tpu_custom_call.1} parent=5 // pred_region
        %s210 = ssub.s32 %s18, 1
        // Predicated region
        $region13: #{tpu_custom_call.1} parent=11 // pred_check
          %p211 = pneg %p65
        $region14: #{tpu_custom_call.1} parent=11 // pred_check_branch
          %213 = sbr.rel (%p211) target = $region16
        $region15: #{tpu_custom_call.1} parent=11 // pred_region
          _
        $region16: #{tpu_custom_call.1} parent=11 // pred_fallthru
          _
        // Predicated region
        $region17: #{tpu_custom_call.1} parent=11 // pred_check
          %p214 = pneg %p86
        $region18: #{tpu_custom_call.1} parent=11 // pred_check_branch
          %216 = sbr.rel (%p214) target = $region20
        $region19: #{tpu_custom_call.1} parent=11 // pred_region
          _
        $region20: #{tpu_custom_call.1} parent=11 // pred_fallthru
          _
        // Predicated region
        $region21: #{tpu_custom_call.1} parent=11 // pred_check
          %p217 = pneg %p107
        $region22: #{tpu_custom_call.1} parent=11 // pred_check_branch
          %219 = sbr.rel (%p217) target = $region24
        $region23: #{tpu_custom_call.1} parent=11 // pred_region
          _
        $region24: #{tpu_custom_call.1} parent=11 // pred_fallthru
          _
        // Predicated region
        $region25: #{tpu_custom_call.1} parent=11 // pred_check
          %p220 = pneg %p128
        $region26: #{tpu_custom_call.1} parent=11 // pred_check_branch
          %222 = sbr.rel (%p220) target = $region28
        $region27: #{tpu_custom_call.1} parent=11 // pred_region
          _
        $region28: #{tpu_custom_call.1} parent=11 // pred_fallthru
          _
        // Predicated region
        $region29: #{tpu_custom_call.1} parent=11 // pred_check
          %p223 = pneg %p149
        $region30: #{tpu_custom_call.1} parent=11 // pred_check_branch
          %225 = sbr.rel (%p223) target = $region32
        $region31: #{tpu_custom_call.1} parent=11 // pred_region
          _
        $region32: #{tpu_custom_call.1} parent=11 // pred_fallthru
          _
        // Predicated region
        $region33: #{tpu_custom_call.1} parent=11 // pred_check
          %p226 = pneg %p170
        $region34: #{tpu_custom_call.1} parent=11 // pred_check_branch
          %228 = sbr.rel (%p226) target = $region36
        $region35: #{tpu_custom_call.1} parent=11 // pred_region
          _
        $region36: #{tpu_custom_call.1} parent=11 // pred_fallthru
          _
      $region12: #{tpu_custom_call.1} parent=5 // pred_fallthru
        _
      %p229 = scmp.lt.s32.totalorder %s18, 2
      // Predicated region
      $region37: #{tpu_custom_call.1} parent=5 // pred_check
        %p230 = pneg %p229
      $region38: #{tpu_custom_call.1} parent=5 // pred_check_branch
        %232 = sbr.rel (%p230) target = $region40
      $region39: #{tpu_custom_call.1} parent=5 // pred_region
        // Predicated region
        $region41: #{tpu_custom_call.1} parent=39 // pred_check
          %p233 = pneg %p38
        $region42: #{tpu_custom_call.1} parent=39 // pred_check_branch
          %235 = sbr.rel (%p233) target = $region44
        $region43: #{tpu_custom_call.1} parent=39 // pred_region
          %s236 = sand.u32 %s28, 1
          %s237 = sand.u32 %s28, 1
          %s238 = smul.addr %s237, 48
          %s239 = scalar_lea.vmem [#allocation3], %s238
          %s240 = smul.u32 2, %s18
          %s241 = smul.addr %s240, 8
          %s242 = scalar_lea.vmem %s0, %s241
          // Predicated region
          $region45: #{tpu_custom_call.1} parent=43 // pred_check
            _
          $region46: #{tpu_custom_call.1} parent=43 // pred_check_branch
            %244 = sbr.rel (0) target = $region48
          $region47: #{tpu_custom_call.1} parent=43 // pred_region
            // Predicated region
            $region49: #{tpu_custom_call.1} parent=47 // pred_check
              _
            $region50: #{tpu_custom_call.1} parent=47 // pred_check_branch
              %246 = sbr.rel (0) target = $region52
            $region51: #{tpu_custom_call.1} parent=47 // pred_region
              loop: start=0, step=1, limit=1
              $region53: #{tpu_custom_call.1} parent=51 // loop_pre_header
                _
              $region54: #{tpu_custom_call.1} parent=51 // loop_header
                %s248 = sphi 0, %s252
                %p249 = scmp.ge.s32.totalorder %s248, 1
                %s253 = sphi %s242, %s242
                %s254 = sphi %s239, %s239
              $region55: #{tpu_custom_call.1} parent=51 // loop_header_branch
                %251 = sbr.rel (%p249) target = $region59
              $region56: #{tpu_custom_call.1} parent=51 // loop_body
                %v255 = vld [vmem:[%s253] sm:$0xff]
                %256 = vst [vmem:[%s254] sm:$0xff] %v255
                %v257 = vld [vmem:[%s253 + $0x8] sm:$0xff]
                %258 = vst [vmem:[%s254 + $0x8] sm:$0xff] %v257
                %v259 = vld [vmem:[%s253 + $0x20] sm:$0xff]
                %260 = vst [vmem:[%s254 + $0x10] sm:$0xff] %v259
                %v261 = vld [vmem:[%s253 + $0x28] sm:$0xff]
                %262 = vst [vmem:[%s254 + $0x18] sm:$0xff] %v261
                %v263 = vld [vmem:[%s253 + $0x40] sm:$0xff]
                %264 = vst [vmem:[%s254 + $0x20] sm:$0xff] %v263
                %v265 = vld [vmem:[%s253 + $0x48] sm:$0xff]
                %266 = vst [vmem:[%s254 + $0x28] sm:$0xff] %v265
              $region57: #{tpu_custom_call.1} parent=51 // loop_footer
                %s252 = sadd.s32 1, %s248
              $region58: #{tpu_custom_call.1} parent=51 // loop_footer_branch
                %247 = sbr.rel target = $region54
              $region59: #{tpu_custom_call.1} parent=51 // loop_exit
                _
            $region52: #{tpu_custom_call.1} parent=47 // pred_fallthru
              _
            // Predicated region
            $region60: #{tpu_custom_call.1} parent=47 // pred_check
              _
            $region61: #{tpu_custom_call.1} parent=47 // pred_check_branch
              %268 = sbr.rel target = $region63
            $region62: #{tpu_custom_call.1} parent=47 // pred_region
              _
            $region63: #{tpu_custom_call.1} parent=47 // pred_fallthru
              _
          $region48: #{tpu_custom_call.1} parent=43 // pred_fallthru
            _
          %269 = vnop
        $region44: #{tpu_custom_call.1} parent=39 // pred_fallthru
          _
      $region40: #{tpu_custom_call.1} parent=5 // pred_fallthru
        _
      %p270 = scmp.le.s32.totalorder 1, %s18
      %p271 = scmp.lt.s32.totalorder %s18, 3
      %p272 = pnand %p270, %p271
      %p273 = pneg %p272
      // Predicated region
      $region64: #{tpu_custom_call.1} parent=5 // pred_check
        _
      $region65: #{tpu_custom_call.1} parent=5 // pred_check_branch
        %275 = sbr.rel (%p272) target = $region67
      $region66: #{tpu_custom_call.1} parent=5 // pred_region
        %s276 = ssub.s32 %s18, 1
        %s277 = sand.u32 %s31, 1
        %s278 = sand.u32 %s31, 1
        %s279 = smul.addr %s278, 48
        %s280 = scalar_lea.vmem [#allocation3], %s279
        // Predicated region
        $region68: #{tpu_custom_call.1} parent=66 // pred_check
          %p281 = pneg %p44
        $region69: #{tpu_custom_call.1} parent=66 // pred_check_branch
          %283 = sbr.rel (%p281) target = $region71
        $region70: #{tpu_custom_call.1} parent=66 // pred_region
          _
        $region71: #{tpu_custom_call.1} parent=66 // pred_fallthru
          _
        %s284 = sand.u32 %s31, 1
        %s285 = sand.u32 %s31, 1
        %s286 = smul.addr %s285, 48
        %s287 = scalar_lea.vmem [#allocation3], %s286
        %p288 = pneg %p44
        %p289 = pneg %p41
        %p290 = pneg %p65
        %p291 = pneg %p62
        %p292 = pneg %p86
        %p293 = pneg %p83
        %p294 = pneg %p107
        %p295 = pneg %p104
        %p296 = pneg %p128
        %p297 = pneg %p125
        %p298 = pneg %p149
        %p299 = pneg %p146
        %p300 = pneg %p170
        %p301 = pneg %p167
        %p302 = pneg %p196
        %p303 = pneg %p193
        %s304 = sand.u32 %s183, 1
        %s305 = scalar_lea.sflag [#allocation5], %s304
        %s306 = sand.u32 %s183, 1
        %s307 = smul.addr %s306, 2
        %s308 = scalar_lea.vmem [#allocation4], %s307
        %s309 = smul.u32 2, %s23
        %s310 = smul.u32 2, %s23
        %v312 = vld [vmem:[%s280] sm:$0xff]
        %v313 = vld [vmem:[%s280 + $0x8] sm:$0xff]
        %v314 = vld [vmem:[%s280 + $0x10] sm:$0xff]
        %v315 = vld [vmem:[%s280 + $0x18] sm:$0xff]
        %v316 = vld [vmem:[%s280 + $0x20] sm:$0xff]
        %v317 = vld [vmem:[%s280 + $0x28] sm:$0xff]
        %v318 = vmax.f32 %v312, %v316
        %v319 = vmax.f32 %v318, %v314
        %v320 = vrot.slane %v319, 4
        %v321 = vmax.f32 %v319, %v320
        %v322 = vrot.slane %v321, 2
        %v323 = vmax.f32 %v321, %v322
        %v324 = vrot.slane %v323, 1
        %v325 = vmax.f32 %v323, %v324
        %v326 = vmax.f32 %v313, %v317
        %v327 = vmax.f32 %v326, %v315
        %v328 = vrot.slane %v327, 4
        %v329 = vmax.f32 %v327, %v328
        %v330 = vrot.slane %v329, 2
        %v331 = vmax.f32 %v329, %v330
        %v332 = vrot.slane %v331, 1
        %v333 = vmax.f32 %v331, %v332
        %v334 = vmin.f32 %v312, %v316
        %v335 = vmin.f32 %v334, %v314
        %v336 = vrot.slane %v335, 4
        %v337 = vmin.f32 %v335, %v336
        %v338 = vrot.slane %v337, 2
        %v339 = vmin.f32 %v337, %v338
        %v340 = vrot.slane %v339, 1
        %v341 = vmin.f32 %v339, %v340
        %v342 = vmin.f32 %v313, %v317
        %v343 = vmin.f32 %v342, %v315
        %v344 = vrot.slane %v343, 4
        %v345 = vmin.f32 %v343, %v344
        %v346 = vrot.slane %v345, 2
        %v347 = vmin.f32 %v345, %v346
        %v348 = vrot.slane %v347, 1
        %v349 = vmin.f32 %v347, %v348
        %v350 = vadd.f32 %v312, %v314
        %v351 = vadd.f32 %v350, %v316
        %v352 = vrot.slane %v351, 4
        %v353 = vadd.f32 %v351, %v352
        %v354 = vrot.slane %v353, 2
        %v355 = vadd.f32 %v353, %v354
        %v356 = vrot.slane %v355, 1
        %v357 = vadd.f32 %v355, %v356
        %v358 = vadd.f32 %v313, %v315
        %v359 = vadd.f32 %v358, %v317
        %v360 = vrot.slane %v359, 4
        %v361 = vadd.f32 %v359, %v360
        %v362 = vrot.slane %v361, 2
        %v363 = vadd.f32 %v361, %v362
        %v364 = vrot.slane %v363, 1
        %v365 = vadd.f32 %v363, %v364
        %v366 = vld [vmem:[%s1] sm:$0xff]
        %v367 = vld [vmem:[%s1 + $0x8] sm:$0xff]
        %v368 = vld [vmem:[%s1 + $0x10] sm:$0xff]
        %v369 = vld [vmem:[%s1 + $0x18] sm:$0xff]
        %v370 = vld [vmem:[%s1 + $0x20] sm:$0xff]
        %v371 = vld [vmem:[%s1 + $0x28] sm:$0xff]
        %v372 = vld [vmem:[%s1 + $0x30] sm:$0xff]
        %v373 = vld [vmem:[%s1 + $0x38] sm:$0xff]
        %375 = vset.pattern.permute.xlu0 0
        %376 = vperm.xlu0 %375, %v366
        %v377 = vpop.permute.xlu0 %376
        %380 = vset.pattern.permute.xlu0 0
        %381 = vperm.xlu0 %380, %v367
        %v382 = vpop.permute.xlu0 %381
        %385 = vset.pattern.permute.xlu0 0
        %386 = vperm.xlu0 %385, %v368
        %v387 = vpop.permute.xlu0 %386
        %390 = vset.pattern.permute.xlu0 0
        %391 = vperm.xlu0 %390, %v369
        %v392 = vpop.permute.xlu0 %391
        %395 = vset.pattern.permute.xlu0 0
        %396 = vperm.xlu0 %395, %v370
        %v397 = vpop.permute.xlu0 %396
        %400 = vset.pattern.permute.xlu0 0
        %401 = vperm.xlu0 %400, %v371
        %v402 = vpop.permute.xlu0 %401
        %405 = vset.pattern.permute.xlu0 0
        %406 = vperm.xlu0 %405, %v372
        %v407 = vpop.permute.xlu0 %406
        %410 = vset.pattern.permute.xlu0 0
        %411 = vperm.xlu0 %410, %v373
        %v412 = vpop.permute.xlu0 %411
        %v414 = vmul.f32 %v377, %v325
        %v415 = vmul.f32 %v377, %v333
        %v416 = vmul.f32 %v382, %v325
        %v417 = vmul.f32 %v382, %v333
        %v418 = vmul.f32 %v387, %v325
        %v419 = vmul.f32 %v387, %v333
        %v420 = vmul.f32 %v392, %v325
        %v421 = vmul.f32 %v392, %v333
        %v422 = vmul.f32 %v397, %v325
        %v423 = vmul.f32 %v397, %v333
        %v424 = vmul.f32 %v402, %v325
        %v425 = vmul.f32 %v402, %v333
        %v426 = vmul.f32 %v407, %v325
        %v427 = vmul.f32 %v407, %v333
        %v428 = vmul.f32 %v412, %v325
        %v429 = vmul.f32 %v412, %v333
        %430 = vset.pattern.permute.xlu0 1
        %431 = vperm.xlu0 %430, %v366
        %v432 = vpop.permute.xlu0 %431
        %434 = vset.pattern.permute.xlu0 1
        %435 = vperm.xlu0 %434, %v367
        %v436 = vpop.permute.xlu0 %435
        %438 = vset.pattern.permute.xlu0 1
        %439 = vperm.xlu0 %438, %v368
        %v440 = vpop.permute.xlu0 %439
        %442 = vset.pattern.permute.xlu0 1
        %443 = vperm.xlu0 %442, %v369
        %v444 = vpop.permute.xlu0 %443
        %446 = vset.pattern.permute.xlu0 1
        %447 = vperm.xlu0 %446, %v370
        %v448 = vpop.permute.xlu0 %447
        %450 = vset.pattern.permute.xlu0 1
        %451 = vperm.xlu0 %450, %v371
        %v452 = vpop.permute.xlu0 %451
        %454 = vset.pattern.permute.xlu0 1
        %455 = vperm.xlu0 %454, %v372
        %v456 = vpop.permute.xlu0 %455
        %458 = vset.pattern.permute.xlu0 1
        %459 = vperm.xlu0 %458, %v373
        %v460 = vpop.permute.xlu0 %459
        %v462 = vmul.f32 %v432, %v341
        %v463 = vmul.f32 %v432, %v349
        %v464 = vmul.f32 %v436, %v341
        %v465 = vmul.f32 %v436, %v349
        %v466 = vmul.f32 %v440, %v341
        %v467 = vmul.f32 %v440, %v349
        %v468 = vmul.f32 %v444, %v341
        %v469 = vmul.f32 %v444, %v349
        %v470 = vmul.f32 %v448, %v341
        %v471 = vmul.f32 %v448, %v349
        %v472 = vmul.f32 %v452, %v341
        %v473 = vmul.f32 %v452, %v349
        %v474 = vmul.f32 %v456, %v341
        %v475 = vmul.f32 %v456, %v349
        %v476 = vmul.f32 %v460, %v341
        %v477 = vmul.f32 %v460, %v349
        %v478 = vadd.f32 %v414, %v462
        %v479 = vadd.f32 %v415, %v463
        %v480 = vadd.f32 %v416, %v464
        %v481 = vadd.f32 %v417, %v465
        %v482 = vadd.f32 %v418, %v466
        %v483 = vadd.f32 %v419, %v467
        %v484 = vadd.f32 %v420, %v468
        %v485 = vadd.f32 %v421, %v469
        %v486 = vadd.f32 %v422, %v470
        %v487 = vadd.f32 %v423, %v471
        %v488 = vadd.f32 %v424, %v472
        %v489 = vadd.f32 %v425, %v473
        %v490 = vadd.f32 %v426, %v474
        %v491 = vadd.f32 %v427, %v475
        %v492 = vadd.f32 %v428, %v476
        %v493 = vadd.f32 %v429, %v477
        %494 = vset.pattern.permute.xlu0 2
        %495 = vperm.xlu0 %494, %v366
        %v496 = vpop.permute.xlu0 %495
        %498 = vset.pattern.permute.xlu0 2
        %499 = vperm.xlu0 %498, %v367
        %v500 = vpop.permute.xlu0 %499
        %502 = vset.pattern.permute.xlu0 2
        %503 = vperm.xlu0 %502, %v368
        %v504 = vpop.permute.xlu0 %503
        %506 = vset.pattern.permute.xlu0 2
        %507 = vperm.xlu0 %506, %v369
        %v508 = vpop.permute.xlu0 %507
        %510 = vset.pattern.permute.xlu0 2
        %511 = vperm.xlu0 %510, %v370
        %v512 = vpop.permute.xlu0 %511
        %514 = vset.pattern.permute.xlu0 2
        %515 = vperm.xlu0 %514, %v371
        %v516 = vpop.permute.xlu0 %515
        %518 = vset.pattern.permute.xlu0 2
        %519 = vperm.xlu0 %518, %v372
        %v520 = vpop.permute.xlu0 %519
        %522 = vset.pattern.permute.xlu0 2
        %523 = vperm.xlu0 %522, %v373
        %v524 = vpop.permute.xlu0 %523
        %v526 = vmul.f32 %v496, %v357
        %v527 = vmul.f32 %v496, %v365
        %v528 = vmul.f32 %v500, %v357
        %v529 = vmul.f32 %v500, %v365
        %v530 = vmul.f32 %v504, %v357
        %v531 = vmul.f32 %v504, %v365
        %v532 = vmul.f32 %v508, %v357
        %v533 = vmul.f32 %v508, %v365
        %v534 = vmul.f32 %v512, %v357
        %v535 = vmul.f32 %v512, %v365
        %v536 = vmul.f32 %v516, %v357
        %v537 = vmul.f32 %v516, %v365
        %v538 = vmul.f32 %v520, %v357
        %v539 = vmul.f32 %v520, %v365
        %v540 = vmul.f32 %v524, %v357
        %v541 = vmul.f32 %v524, %v365
        %v542 = vadd.f32 %v478, %v526
        %v543 = vadd.f32 %v479, %v527
        %v544 = vadd.f32 %v480, %v528
        %v545 = vadd.f32 %v481, %v529
        %v546 = vadd.f32 %v482, %v530
        %v547 = vadd.f32 %v483, %v531
        %v548 = vadd.f32 %v484, %v532
        %v549 = vadd.f32 %v485, %v533
        %v550 = vadd.f32 %v486, %v534
        %v551 = vadd.f32 %v487, %v535
        %v552 = vadd.f32 %v488, %v536
        %v553 = vadd.f32 %v489, %v537
        %v554 = vadd.f32 %v490, %v538
        %v555 = vadd.f32 %v491, %v539
        %v556 = vadd.f32 %v492, %v540
        %v557 = vadd.f32 %v493, %v541
        %v558 = vld [vmem:[%s2] sm:$0xff]
        %v559 = vld [vmem:[%s2 + $0x8] sm:$0xff]
        %v560 = vld [vmem:[%s2 + $0x10] sm:$0xff]
        %v561 = vld [vmem:[%s2 + $0x18] sm:$0xff]
        %v562 = vld [vmem:[%s2 + $0x20] sm:$0xff]
        %v563 = vld [vmem:[%s2 + $0x28] sm:$0xff]
        %v564 = vld [vmem:[%s2 + $0x30] sm:$0xff]
        %v565 = vld [vmem:[%s2 + $0x38] sm:$0xff]
        %567 = vset.pattern.permute.xlu0 0
        %568 = vperm.xlu0 %567, %v558
        %v569 = vpop.permute.xlu0 %568
        %572 = vset.pattern.permute.xlu0 0
        %573 = vperm.xlu0 %572, %v559
        %v574 = vpop.permute.xlu0 %573
        %577 = vset.pattern.permute.xlu0 0
        %578 = vperm.xlu0 %577, %v560
        %v579 = vpop.permute.xlu0 %578
        %582 = vset.pattern.permute.xlu0 0
        %583 = vperm.xlu0 %582, %v561
        %v584 = vpop.permute.xlu0 %583
        %587 = vset.pattern.permute.xlu0 0
        %588 = vperm.xlu0 %587, %v562
        %v589 = vpop.permute.xlu0 %588
        %592 = vset.pattern.permute.xlu0 0
        %593 = vperm.xlu0 %592, %v563
        %v594 = vpop.permute.xlu0 %593
        %597 = vset.pattern.permute.xlu0 0
        %598 = vperm.xlu0 %597, %v564
        %v599 = vpop.permute.xlu0 %598
        %602 = vset.pattern.permute.xlu0 0
        %603 = vperm.xlu0 %602, %v565
        %v604 = vpop.permute.xlu0 %603
        %v606 = vadd.f32 %v542, %v569
        %v607 = vadd.f32 %v543, %v569
        %v608 = vadd.f32 %v544, %v574
        %v609 = vadd.f32 %v545, %v574
        %v610 = vadd.f32 %v546, %v579
        %v611 = vadd.f32 %v547, %v579
        %v612 = vadd.f32 %v548, %v584
        %v613 = vadd.f32 %v549, %v584
        %v614 = vadd.f32 %v550, %v589
        %v615 = vadd.f32 %v551, %v589
        %v616 = vadd.f32 %v552, %v594
        %v617 = vadd.f32 %v553, %v594
        %v618 = vadd.f32 %v554, %v599
        %v619 = vadd.f32 %v555, %v599
        %v620 = vadd.f32 %v556, %v604
        %v621 = vadd.f32 %v557, %v604
        %v622 = vmax.f32 %v606, 0.0
        %v623 = vmax.f32 %v607, 0.0
        %v624 = vmax.f32 %v608, 0.0
        %v625 = vmax.f32 %v609, 0.0
        %v626 = vmax.f32 %v610, 0.0
        %v627 = vmax.f32 %v611, 0.0
        %v628 = vmax.f32 %v612, 0.0
        %v629 = vmax.f32 %v613, 0.0
        %v630 = vmax.f32 %v614, 0.0
        %v631 = vmax.f32 %v615, 0.0
        %v632 = vmax.f32 %v616, 0.0
        %v633 = vmax.f32 %v617, 0.0
        %v634 = vmax.f32 %v618, 0.0
        %v635 = vmax.f32 %v619, 0.0
        %v636 = vmax.f32 %v620, 0.0
        %v637 = vmax.f32 %v621, 0.0
        %v638 = vld [vmem:[%s3] sm:$0xf]
        %v639 = vld [vmem:[%s3 + $0x4] sm:$0xf]
        %v640 = vld [vmem:[%s3 + $0x8] sm:$0xf]
        %v641 = vld [vmem:[%s3 + $0xc] sm:$0xf]
        %v642 = vld [vmem:[%s3 + $0x10] sm:$0xf]
        %v643 = vld [vmem:[%s3 + $0x14] sm:$0xf]
        %v644 = vld [vmem:[%s3 + $0x18] sm:$0xf]
        %v645 = vld [vmem:[%s3 + $0x1c] sm:$0xf]
        %v646 = vpack.c.bf16 %v624, %v622
        %v647 = vpack.c.bf16 %v625, %v623
        %v648 = vpack.c.bf16 %v628, %v626
        %v649 = vpack.c.bf16 %v629, %v627
        %v650 = vpack.c.bf16 %v632, %v630
        %v651 = vpack.c.bf16 %v633, %v631
        %v652 = vpack.c.bf16 %v636, %v634
        %v653 = vpack.c.bf16 %v637, %v635
        %v654 = vld [vmem:[%s4] sm:$0xff]
        %v655 = vld [vmem:[%s4 + $0x8] sm:$0xff]
        %v656 = vld [vmem:[%s4 + $0x10] sm:$0xff]
        %v657 = vld [vmem:[%s4 + $0x18] sm:$0xff]
        %v658 = vld [vmem:[%s4 + $0x20] sm:$0xff]
        %v659 = vld [vmem:[%s4 + $0x28] sm:$0xff]
        %v660 = vld [vmem:[%s4 + $0x30] sm:$0xff]
        %v661 = vld [vmem:[%s4 + $0x38] sm:$0xff]
        %663 = vset.pattern.permute.xlu0 0
        %664 = vperm.xlu0 %663, %v654
        %v665 = vpop.permute.xlu0 %664
        %668 = vset.pattern.permute.xlu0 0
        %669 = vperm.xlu0 %668, %v655
        %v670 = vpop.permute.xlu0 %669
        %673 = vset.pattern.permute.xlu0 0
        %674 = vperm.xlu0 %673, %v656
        %v675 = vpop.permute.xlu0 %674
        %678 = vset.pattern.permute.xlu0 0
        %679 = vperm.xlu0 %678, %v657
        %v680 = vpop.permute.xlu0 %679
        %683 = vset.pattern.permute.xlu0 0
        %684 = vperm.xlu0 %683, %v658
        %v685 = vpop.permute.xlu0 %684
        %688 = vset.pattern.permute.xlu0 0
        %689 = vperm.xlu0 %688, %v659
        %v690 = vpop.permute.xlu0 %689
        %693 = vset.pattern.permute.xlu0 0
        %694 = vperm.xlu0 %693, %v660
        %v695 = vpop.permute.xlu0 %694
        %698 = vset.pattern.permute.xlu0 0
        %699 = vperm.xlu0 %698, %v661
        %v700 = vpop.permute.xlu0 %699
        %v710 = vunpack.c.l.b16 %v638
        %v711 = vunpack.c.l.b16 %v639
        %v712 = vunpack.c.l.b16 %v640
        %v713 = vunpack.c.l.b16 %v641
        %v714 = vunpack.c.l.b16 %v642
        %v715 = vunpack.c.l.b16 %v643
        %v716 = vunpack.c.l.b16 %v644
        %v717 = vunpack.c.l.b16 %v645
        %v718 = vpack.c.b16 %v711, %v710
        %v719 = vpack.c.b16 %v713, %v712
        %v720 = vpack.c.b16 %v715, %v714
        %v721 = vpack.c.b16 %v717, %v716
        %vm722 = vcmask 523264
        %v724 = vsel %vm722, %v718, 0
        %v727 = vsel %vm722, %v719, 0
        %v730 = vsel %vm722, %v720, 0
        %v733 = vsel %vm722, %v721, 0
        %735 = vmatprep.subr.bf16.mxu0 %v647
        %736 = vmatpush1.bf16.msra.mxu0 %v646
        %737 = vmatprep.subr.bf16.mxu0 %v649
        %738 = vmatpush1.bf16.msra.mxu0 %v648
        %739 = vmatprep.subr.bf16.mxu0 %v651
        %740 = vmatpush1.bf16.msra.mxu0 %v650
        %741 = vmatprep.subr.bf16.mxu0 %v653
        %742 = vmatpush1.bf16.msra.mxu0 %v652
        %743 = vmatprep.subr.bf16.mxu0 0
        %744 = vmatpush1.bf16.msra.mxu0 0
        %745 = vmatprep.subr.bf16.mxu0 0
        %746 = vmatpush1.bf16.msra.mxu0 0
        %747 = vmatprep.subr.bf16.mxu0 0
        %748 = vmatpush1.bf16.msra.mxu0 0
        %749 = vmatprep.subr.bf16.mxu0 0
        %750 = vmatpush1.bf16.msra.mxu0 0
        %751 = vmatprep.subr.bf16.mxu0 0
        %752 = vmatpush1.bf16.msra.mxu0 0
        %753 = vmatprep.subr.bf16.mxu0 0
        %754 = vmatpush1.bf16.msra.mxu0 0
        %755 = vmatprep.subr.bf16.mxu0 0
        %756 = vmatpush1.bf16.msra.mxu0 0
        %757 = vmatprep.subr.bf16.mxu0 0
        %758 = vmatpush1.bf16.msra.mxu0 0
        %759 = vmatprep.subr.bf16.mxu0 0
        %760 = vmatpush1.bf16.msra.mxu0 0
        %761 = vmatprep.subr.bf16.mxu0 0
        %762 = vmatpush1.bf16.msra.mxu0 0
        %763 = vmatprep.subr.bf16.mxu0 0
        %764 = vmatpush1.bf16.msra.mxu0 0
        %765 = vmatprep.subr.bf16.mxu0 0
        %766 = vmatpush1.bf16.msra.mxu0 0
        %767 = vmatprep.mubr.bf16.mxu0 0
        %768 = vmatmul.mubr.bf16.gmra.mrb[0].mxu0 %v724
        %v769 = vpop.f32.mrb[0].mxu0
        %v770 = vadd.f32 %v665, %v769
        %v771 = vpop.f32.mrb[0].mxu0
        %v772 = vadd.f32 %v665, %v771
        %v773 = vpop.f32.mrb[0].mxu0
        %v774 = vadd.f32 %v670, %v773
        %v775 = vpop.f32.mrb[0].mxu0
        %v776 = vadd.f32 %v670, %v775
        %777 = vmatprep.mubr.bf16.mxu0 0
        %778 = vmatmul.mubr.bf16.gmra.mrb[0].mxu0 %v727
        %v779 = vpop.f32.mrb[0].mxu0
        %v780 = vadd.f32 %v675, %v779
        %v781 = vpop.f32.mrb[0].mxu0
        %v782 = vadd.f32 %v675, %v781
        %v783 = vpop.f32.mrb[0].mxu0
        %v784 = vadd.f32 %v680, %v783
        %v785 = vpop.f32.mrb[0].mxu0
        %v786 = vadd.f32 %v680, %v785
        %787 = vmatprep.mubr.bf16.mxu0 0
        %788 = vmatmul.mubr.bf16.gmra.mrb[0].mxu0 %v730
        %v789 = vpop.f32.mrb[0].mxu0
        %v790 = vadd.f32 %v685, %v789
        %v791 = vpop.f32.mrb[0].mxu0
        %v792 = vadd.f32 %v685, %v791
        %v793 = vpop.f32.mrb[0].mxu0
        %v794 = vadd.f32 %v690, %v793
        %v795 = vpop.f32.mrb[0].mxu0
        %v796 = vadd.f32 %v690, %v795
        %797 = vmatprep.mubr.bf16.mxu0 0
        %798 = vmatmul.mubr.bf16.gmra.mrb[0].mxu0 %v733
        %v799 = vpop.f32.mrb[0].mxu0
        %v800 = vadd.f32 %v695, %v799
        %v801 = vpop.f32.mrb[0].mxu0
        %v802 = vadd.f32 %v695, %v801
        %v803 = vpop.f32.mrb[0].mxu0
        %v804 = vadd.f32 %v700, %v803
        %v805 = vpop.f32.mrb[0].mxu0
        %v806 = vadd.f32 %v700, %v805
        %807 = vdwg.mxu0
        %v808 = vmax.f32 %v770, 0.0
        %v809 = vmax.f32 %v772, 0.0
        %v810 = vmax.f32 %v774, 0.0
        %v811 = vmax.f32 %v776, 0.0
        %v812 = vmax.f32 %v780, 0.0
        %v813 = vmax.f32 %v782, 0.0
        %v814 = vmax.f32 %v784, 0.0
        %v815 = vmax.f32 %v786, 0.0
        %v816 = vmax.f32 %v790, 0.0
        %v817 = vmax.f32 %v792, 0.0
        %v818 = vmax.f32 %v794, 0.0
        %v819 = vmax.f32 %v796, 0.0
        %v820 = vmax.f32 %v800, 0.0
        %v821 = vmax.f32 %v802, 0.0
        %v822 = vmax.f32 %v804, 0.0
        %v823 = vmax.f32 %v806, 0.0
        %v824 = vld [vmem:[%s5] sm:$0xff]
        %v825 = vld [vmem:[%s5 + $0x8] sm:$0xff]
        %v826 = vld [vmem:[%s5 + $0x10] sm:$0xff]
        %v827 = vld [vmem:[%s5 + $0x18] sm:$0xff]
        %v828 = vld [vmem:[%s5 + $0x20] sm:$0xff]
        %v829 = vld [vmem:[%s5 + $0x28] sm:$0xff]
        %v830 = vld [vmem:[%s5 + $0x30] sm:$0xff]
        %v831 = vld [vmem:[%s5 + $0x38] sm:$0xff]
        %833 = vset.pattern.permute.xlu0 0
        %834 = vperm.xlu0 %833, %v824
        %v835 = vpop.permute.xlu0 %834
        %838 = vset.pattern.permute.xlu0 0
        %839 = vperm.xlu0 %838, %v825
        %v840 = vpop.permute.xlu0 %839
        %843 = vset.pattern.permute.xlu0 0
        %844 = vperm.xlu0 %843, %v826
        %v845 = vpop.permute.xlu0 %844
        %848 = vset.pattern.permute.xlu0 0
        %849 = vperm.xlu0 %848, %v827
        %v850 = vpop.permute.xlu0 %849
        %853 = vset.pattern.permute.xlu0 0
        %854 = vperm.xlu0 %853, %v828
        %v855 = vpop.permute.xlu0 %854
        %858 = vset.pattern.permute.xlu0 0
        %859 = vperm.xlu0 %858, %v829
        %v860 = vpop.permute.xlu0 %859
        %863 = vset.pattern.permute.xlu0 0
        %864 = vperm.xlu0 %863, %v830
        %v865 = vpop.permute.xlu0 %864
        %868 = vset.pattern.permute.xlu0 0
        %869 = vperm.xlu0 %868, %v831
        %v870 = vpop.permute.xlu0 %869
        %v872 = vmul.f32 %v808, %v835
        %v873 = vmul.f32 %v809, %v835
        %v874 = vmul.f32 %v810, %v840
        %v875 = vmul.f32 %v811, %v840
        %v876 = vmul.f32 %v812, %v845
        %v877 = vmul.f32 %v813, %v845
        %v878 = vmul.f32 %v814, %v850
        %v879 = vmul.f32 %v815, %v850
        %v880 = vmul.f32 %v816, %v855
        %v881 = vmul.f32 %v817, %v855
        %v882 = vmul.f32 %v818, %v860
        %v883 = vmul.f32 %v819, %v860
        %v884 = vmul.f32 %v820, %v865
        %v885 = vmul.f32 %v821, %v865
        %v886 = vmul.f32 %v822, %v870
        %v887 = vmul.f32 %v823, %v870
        %v888 = vadd.f32 %v872, %v874
        %v889 = vadd.f32 %v888, %v876
        %v890 = vadd.f32 %v889, %v878
        %v891 = vadd.f32 %v890, %v880
        %v892 = vadd.f32 %v891, %v882
        %v893 = vadd.f32 %v892, %v884
        %v894 = vadd.f32 %v893, %v886
        %v895 = vrot.slane %v894, 4
        %v896 = vadd.f32 %v894, %v895
        %v897 = vrot.slane %v896, 2
        %v898 = vadd.f32 %v896, %v897
        %v899 = vrot.slane %v898, 1
        %v900 = vadd.f32 %v898, %v899
        %v901 = vadd.f32 %v873, %v875
        %v902 = vadd.f32 %v901, %v877
        %v903 = vadd.f32 %v902, %v879
        %v904 = vadd.f32 %v903, %v881
        %v905 = vadd.f32 %v904, %v883
        %v906 = vadd.f32 %v905, %v885
        %v907 = vadd.f32 %v906, %v887
        %v908 = vrot.slane %v907, 4
        %v909 = vadd.f32 %v907, %v908
        %v910 = vrot.slane %v909, 2
        %v911 = vadd.f32 %v909, %v910
        %v912 = vrot.slane %v911, 1
        %v913 = vadd.f32 %v911, %v912
        %v914 = vld [vmem:[#allocation2] sm:$0x1]
        %916 = vset.pattern.permute.xlu0 0
        %917 = vperm.xlu0 %916, %v914
        %v918 = vpop.permute.xlu0 %917
        %v920 = vlaneseq
        %v921 = vshrl.u32 %v920, 7
        %v922 = vsub.s32 0, %v921
        %v923 = vrot.slane %v918, %v922
        %v924 = vadd.f32 %v900, %v923
        %v925 = vadd.f32 %v913, %v923
        %v926 = vxor.u32 %v924, 2147483648
        %v927 = vxor.u32 %v925, 2147483648
        %v928 = vmul.f32 %v926, 1.442695
        %v929 = vpow.pop %v928
        %v930 = vmul.f32 %v927, 1.442695
        %v931 = vpow.pop %v930
        %v932 = vadd.f32 %v929, 1.0
        %v933 = vadd.f32 %v931, 1.0
        %v934 = vrcp.pop %v932
        %v935 = vmul.f32 1.0, %v934
        %v936 = vrcp.pop %v933
        %v937 = vmul.f32 1.0, %v936
        %v940 = vcombine.low %v935, %v937
        %v942 = vunpack.c.l.s4 1966171168
        %v943 = vunpack.c.0.s8 %v942
        %v944 = vlaneseq
        %v945 = vshrl.u32 %v944, 7
        %v946 = vsub.s32 %v943, %v945
        %v947 = vrot.slane %v940, %v946
        %v949 = vunpack.c.l.s4 1966171168
        %v950 = vunpack.c.0.s8 %v949
        %v951 = vlaneseq
        %v952 = vshrl.u32 %v951, 7
        %v953 = vsub.s32 %v950, %v952
        %v954 = vrot.slane %v947, %v953
        %v956 = vlaneseq
        %vm957 = vcmp.ge.s32.totalorder %v956, 0
        %vm958 = vcmp.lt.s32.totalorder %v956, 256
        %vm959 = vmand %vm957, %vm958
        %960 = vst.msk [vmem:[%s308] sm:$0x3] %vm959, %v954
        %s961 = sand.u32 %s183, 1
        %s962 = scalar_lea.sflag [#allocation5], %s961
        %s963 = sand.u32 %s183, 1
        %s964 = smul.addr %s963, 2
        %s965 = scalar_lea.vmem [#allocation4], %s964
        // Predicated region
        $region72: #{tpu_custom_call.1} parent=66 // pred_check
          %p966 = pneg %p193
        $region73: #{tpu_custom_call.1} parent=66 // pred_check_branch
          %968 = sbr.rel (%p966) target = $region75
        $region74: #{tpu_custom_call.1} parent=66 // pred_region
          %s969 = smul.u32 2, %s23
          %s971 = ssub.s32 32, 32
          %972 = vsyncadd %s962, %s971
          %s973 = smul.addr %s969, 16
          %s974 = scalar_lea.hbm %s7, %s973
          %s976 = sshll.u32 %s965, 4
          %s977 = int_to_ptr.vmem [resolvable:$true] %s976
          %979 = dma.vmem_to_hbm [thread:$0]  %s977, 32, %s974, %s962
        $region75: #{tpu_custom_call.1} parent=66 // pred_fallthru
          _
      $region67: #{tpu_custom_call.1} parent=5 // pred_fallthru
        _
      %p980 = scmp.le.s32.totalorder 2, %s18
      // Predicated region
      $region76: #{tpu_custom_call.1} parent=5 // pred_check
        %p981 = pneg %p980
      $region77: #{tpu_custom_call.1} parent=5 // pred_check_branch
        %983 = sbr.rel (%p981) target = $region79
      $region78: #{tpu_custom_call.1} parent=5 // pred_region
        %s984 = ssub.s32 %s18, 2
        // Predicated region
        $region80: #{tpu_custom_call.1} parent=78 // pred_check
          %p985 = pneg %p199
        $region81: #{tpu_custom_call.1} parent=78 // pred_check_branch
          %987 = sbr.rel (%p985) target = $region83
        $region82: #{tpu_custom_call.1} parent=78 // pred_region
          %s988 = sand.u32 %s184, 1
          %s989 = scalar_lea.sflag [#allocation5], %s988
          %s990 = sand.u32 %s184, 1
          %s991 = smul.addr %s990, 2
          %s992 = scalar_lea.vmem [#allocation4], %s991
          %993 = dma.done %s989, 32
        $region83: #{tpu_custom_call.1} parent=78 // pred_fallthru
          _
      $region79: #{tpu_custom_call.1} parent=5 // pred_fallthru
        _
    $region6: #{tpu_custom_call.1} parent=1 // loop_footer
      %s22 = sadd.s32 1, %s18
    $region7: #{tpu_custom_call.1} parent=1 // loop_footer_branch
      %17 = sbr.rel target = $region3
    $region8: #{tpu_custom_call.1} parent=1 // loop_exit
      _
    %994 = vsyncpa [#allocation5], 1
    %s995 = scalar_lea.sflag [#allocation5], 1
    %996 = vsyncpa %s995, 1

</llo_original>
